<compile_context>
chip_gen: v7x
topology: tpu7x:2x2x1
jax: 0.10.0
libtpu: 0.0.40
codegen_flags: <defaults>
</compile_context>

<pallas_src>
import functools

import jax
import jax.numpy as jnp
from jax.experimental import pallas as pl
from jax.experimental.pallas import tpu as pltpu


def _round_up(x, m):
    return ((x + m - 1) // m) * m


def _pad2d(a, rows, cols):
    """Zero-pad a 2-D array to (rows, cols); no-op (no copy) if already aligned."""
    r, c = a.shape
    if (r, c) == (rows, cols):
        return a
    return jnp.zeros((rows, cols), a.dtype).at[:r, :c].set(a)


def _pad1d(a, n):
    if a.shape[0] == n:
        return a
    return jnp.zeros((n,), a.dtype).at[:a.shape[0]].set(a)


def _choose_n_tile(H2, itemsize, Hp, n_tile_max=512):
    """Pick the 2H slab width (multiple of 128) and the padded 2H size.

    Prefers fat 512-wide slabs (padding 2H up to the slab width) so the inner
    trip count stays low and W1 DMAs stay wide; caps at 256 for very large f32
    H so the double-buffered W1 slab stays modest on v7x's 64 MiB VMEM.
    """
    pref = n_tile_max
    if itemsize >= 4 and Hp >= 4096:
        pref = min(pref, 256)
    h2_min = _round_up(H2, 128)
    if h2_min <= pref:
        return h2_min, h2_min
    # Accept a fat slab unless it adds more than ~25% padded columns.
    for cand in (512, 384, 256):
        if cand > pref:
            continue
        padded = _round_up(H2, cand)
        if padded <= h2_min + max(128, h2_min // 4):
            return cand, padded
    return 128, h2_min


def _is_multi_core_chip():
    """True on chips with 2 TensorCores sharing HBM (v7x-style)."""
    try:
        kind = jax.local_devices()[0].device_kind.lower()
    except Exception:
        return False
    return ("v7" in kind) or ("7x" in kind)


def _mlp_kernel(x_ref, w1_ref, b1_ref, w2_ref, b2_ref, o_ref, acc_ref, *,
                n_tile, pin_w2):
    """Grid = (batch tiles, 2H slabs).  Reduction over the slab axis."""
    n = pl.program_id(1)

    @pl.when(n == 0)
    def _init():
        acc_ref[...] = jnp.zeros_like(acc_ref)

    # First linear on the current 2H slab + bias + ReLU (f32 MXU accumulation).
    h = jnp.dot(x_ref[...], w1_ref[...], preferred_element_type=jnp.float32)
    h = jnp.maximum(h + b1_ref[pl.ds(n, 1), :], 0.0)

    # Second linear: accumulate this slab's contribution into the f32 scratch.
    # W2 is either fully VMEM-resident (slice the matching row slab) or — for
    # very large W2 — streamed as a row slab per step.
    if pin_w2:
        start = pl.multiple_of(n * n_tile, n_tile)
        w2_slab = w2_ref[pl.ds(start, n_tile), :]
    else:
        w2_slab = w2_ref[...]
    acc_ref[...] += jnp.dot(h.astype(w2_slab.dtype), w2_slab,
                            preferred_element_type=jnp.float32)

    @pl.when(n == pl.num_programs(1) - 1)
    def _finalize():
        o_ref[...] = (acc_ref[...] + b2_ref[...]).astype(o_ref.dtype)


def prepare_params(w1, b1, w2, b2, *, compute_dtype=jnp.bfloat16, n_tile_max=512):
    """Pad + cast the weights once (hoisted out of the per-call path).

    Zero padding is mathematically inert: padded 2H columns give ReLU(0+0)=0
    which multiplies zero W2 rows; padded output columns are sliced off.
    Biases stay in float32.
    """
    H, H2 = w1.shape
    D = w2.shape[1]
    assert w2.shape[0] == H2 and b1.shape == (H2,) and b2.shape == (D,)

    dtype = jnp.dtype(compute_dtype if compute_dtype is not None else w1.dtype)
    itemsize = dtype.itemsize

    Hp = _round_up(H, 128)
    # v6e/v7x MXUs are 256 wide: pad a non-trivial output dim to 256.
    Dp = _round_up(D, 256) if D > 128 else _round_up(D, 128)
    n_tile, H2p = _choose_n_tile(H2, itemsize, Hp, n_tile_max)

    w1p = _pad2d(w1.astype(dtype), Hp, H2p)
    w2p = _pad2d(w2.astype(dtype), H2p, Dp)
    b1p = _pad1d(b1.astype(jnp.float32), H2p).reshape(H2p // n_tile, n_tile)
    b2p = _pad1d(b2.astype(jnp.float32), Dp).reshape(1, Dp)

    return dict(w1=w1p, b1=b1p, w2=w2p, b2=b2p, dims=(H, H2, D), n_tile=n_tile)


def domain_discriminator_apply(params, x, *, batch_tile=512, w1_buffers=2,
                               force_two_batch_tiles=None):
    """Apply the fused MLP to x: [B, H] -> [B, domain_num]."""
    H, H2, D = params["dims"]
    n_tile = params["n_tile"]
    w1p, b1p, w2p, b2p = params["w1"], params["b1"], params["w2"], params["b2"]
    Hp, H2p = w1p.shape
    Dp = w2p.shape[1]
    n_steps = H2p // n_tile

    B, Hx = x.shape
    assert Hx == H, f"expected input feature dim {H}, got {Hx}"

    out_dtype = x.dtype
    compute_dtype = w1p.dtype
    itemsize = jnp.dtype(compute_dtype).itemsize
    out_itemsize = jnp.dtype(out_dtype).itemsize
    x = x.astype(compute_dtype)

    # Sublane granularity: 8 rows for 32-bit, 16 for packed 16-bit dtypes.
    sub = 8 if itemsize >= 4 else 16

    bt = max(sub, min(batch_tile, _round_up(B, sub)))
    bt = _round_up(bt, sub)

    # v7x megacore: the batch axis is the "parallel" one; make sure it has at
    # least two tiles so both TensorCores get work (no-op on 1-TC chips).
    if force_two_batch_tiles is None:
        force_two_batch_tiles = _is_multi_core_chip()
    if force_two_batch_tiles and (_round_up(B, bt) // bt) < 2 and B >= 2 * sub:
        bt = _round_up(-(-B // 2), sub)

    Bp = _round_up(B, bt)
    xp = _pad2d(x, Bp, Hp)          # skipped entirely when already aligned

    n_batch_tiles = Bp // bt
    grid = (n_batch_tiles, n_steps)

    # Pin W2 in VMEM (DMA'd once) unless it is genuinely large.
    pin_w2 = (2 * H2p * Dp * itemsize) <= (16 << 20)

    # W1 is the dominant streamed operand; optionally deepen its pipeline
    # (e.g. w1_buffers=3 on v5e if profiling shows exposed DMA and VMEM allows).
    w1_kwargs = {}
    if w1_buffers and int(w1_buffers) > 2:
        w1_kwargs["pipeline_mode"] = pl.Buffered(int(w1_buffers))
    w1_spec = pl.BlockSpec((Hp, n_tile), lambda i, n: (0, n), **w1_kwargs)

    if pin_w2:
        w2_spec = pl.BlockSpec((H2p, Dp), lambda i, n: (0, 0))
    else:
        w2_spec = pl.BlockSpec((n_tile, Dp), lambda i, n: (n, 0))

    # Explicit scoped-VMEM budget (defaults are only 16 MiB v5e / 32 MiB v6e+).
    n_w1_buf = max(2, int(w1_buffers) if w1_buffers else 2)
    w2_resident = 2 * (H2p if pin_w2 else n_tile) * Dp * itemsize
    footprint = (2 * bt * Hp * itemsize            # x tile (double buffered)
                 + n_w1_buf * Hp * n_tile * itemsize
                 + 2 * H2p * 4                     # b1 (pinned, f32)
                 + w2_resident                     # W2
                 + 2 * Dp * 4                      # b2
                 + 2 * bt * Dp * out_itemsize      # output tile
                 + bt * Dp * 4)                    # f32 accumulator scratch
    vmem_limit = int(min(max(footprint * 3 // 2, 32 << 20), 127 << 20))

    cost = pl.CostEstimate(
        flops=2 * B * H * H2 + 2 * B * H2 * D,
        transcendentals=0,
        bytes_accessed=(Bp * Hp * itemsize                       # x read once
                        + n_batch_tiles * Hp * H2p * itemsize    # W1 streamed per batch tile
                        + (1 if pin_w2 else n_batch_tiles) * H2p * Dp * itemsize
                        + (H2p + Dp) * 4                         # biases
                        + Bp * Dp * out_itemsize),               # output
    )

    out = pl.pallas_call(
        functools.partial(_mlp_kernel, n_tile=n_tile, pin_w2=pin_w2),
        out_shape=jax.ShapeDtypeStruct((Bp, Dp), out_dtype),
        grid_spec=pltpu.PrefetchScalarGridSpec(
            num_scalar_prefetch=0,
            grid=grid,
            in_specs=[
                pl.BlockSpec((bt, Hp), lambda i, n: (i, 0)),          # x batch tile
                w1_spec,                                               # W1 2H-slab (streamed)
                pl.BlockSpec((n_steps, n_tile), lambda i, n: (0, 0)),  # b1 (pinned)
                w2_spec,                                               # W2 (pinned or slab)
                pl.BlockSpec((1, Dp), lambda i, n: (0, 0)),            # b2 (pinned)
            ],
            out_specs=pl.BlockSpec((bt, Dp), lambda i, n: (i, 0)),     # resident over n
            scratch_shapes=[pltpu.VMEM((bt, Dp), jnp.float32)],        # f32 accumulator
        ),
        compiler_params=pltpu.CompilerParams(
            dimension_semantics=("parallel", "arbitrary"),
            vmem_limit_bytes=vmem_limit),
        cost_estimate=cost,
    )(xp, w1p, b1p, w2p, b2p)

    if (Bp, Dp) != (B, D):
        out = out[:B, :D]
    return out


def domain_discriminator_forward(x, w1, b1, w2, b2, *,
                                 compute_dtype=jnp.bfloat16,
                                 batch_tile=512, n_tile_max=512,
                                 w1_buffers=2, force_two_batch_tiles=None):
    """Convenience one-shot: x [B,H], w1 [H,2H], b1 [2H], w2 [2H,D], b2 [D] -> [B,D].

    For repeated calls, prefer `make_domain_discriminator` so weight padding /
    casting is paid once instead of per call.
    """
    params = prepare_params(w1, b1, w2, b2, compute_dtype=compute_dtype,
                            n_tile_max=n_tile_max)
    return domain_discriminator_apply(params, x, batch_tile=batch_tile,
                                      w1_buffers=w1_buffers,
                                      force_two_batch_tiles=force_two_batch_tiles)


def make_domain_discriminator(w1, b1, w2, b2, *, compute_dtype=jnp.bfloat16,
                              n_tile_max=512, **call_kwargs):
    """Pad/cast the weights once and return `forward(x) -> logits`."""
    params = prepare_params(w1, b1, w2, b2, compute_dtype=compute_dtype,
                            n_tile_max=n_tile_max)

    def forward(x):
        return domain_discriminator_apply(params, x, **call_kwargs)

    return forward


def init_params(key, hidden_size, domain_num, dtype=jnp.float32):
    """Deterministic synthetic init mimicking nn.Linear (uniform +-1/sqrt(fan_in))."""
    k1, k2, k3, k4 = jax.random.split(key, 4)
    h2 = hidden_size * 2
    lim1 = 1.0 / jnp.sqrt(hidden_size)
    lim2 = 1.0 / jnp.sqrt(h2)
    w1 = jax.random.uniform(k1, (hidden_size, h2), dtype, -lim1, lim1)
    b1 = jax.random.uniform(k2, (h2,), dtype, -lim1, lim1)
    w2 = jax.random.uniform(k3, (h2, domain_num), dtype, -lim2, lim2)
    b2 = jax.random.uniform(k4, (domain_num,), dtype, -lim2, lim2)
    return w1, b1, w2, b2


def _reference(x, w1, b1, w2, b2):
    hi = jax.lax.Precision.HIGHEST
    h = jnp.maximum(jnp.dot(x, w1, precision=hi) + b1, 0.0)
    return jnp.dot(h, w2, precision=hi) + b2


if __name__ == "__main__":
    # --- Small shapes implied by the module: hidden=32, domain_num=4, batch=8.
    hidden_size = 32
    domain_num = 4
    batch = 8

    key = jax.random.PRNGKey(0)
    kx, kp = jax.random.split(key)
    x = jax.random.normal(kx, (batch, hidden_size), dtype=jnp.float32)
    w1, b1, w2, b2 = init_params(kp, hidden_size, domain_num)

    ref = _reference(x, w1, b1, w2, b2)

    # f32 compute path: near-exact check.
    out_f32 = domain_discriminator_forward(x, w1, b1, w2, b2,
                                           compute_dtype=jnp.float32)
    out_f32 = jax.block_until_ready(out_f32)
    assert out_f32.shape == (batch, domain_num)
    assert jnp.allclose(out_f32, ref, atol=1e-5, rtol=1e-5)

    # Default path: bf16 weights/activations, f32 accumulation; weights padded
    # once via make_domain_discriminator (per-call padding hoisted out).
    fwd = make_domain_discriminator(w1, b1, w2, b2)
    out_bf16 = jax.block_until_ready(fwd(x))
    assert out_bf16.shape == (batch, domain_num)
    assert jnp.allclose(out_bf16, ref, atol=5e-2, rtol=5e-2)

    # Moderate shapes: exercises >1 slabs on the 2H reduction axis and >1 batch
    # tiles (accumulator re-init per batch tile), still cheap.
    hs2, dn2, b2n = 320, 5, 40
    x2 = jax.random.normal(jax.random.PRNGKey(1), (b2n, hs2), dtype=jnp.float32)
    w1b, b1b, w2b, b2b = init_params(jax.random.PRNGKey(2), hs2, dn2)
    ref2 = _reference(x2, w1b, b1b, w2b, b2b)
    out2 = domain_discriminator_forward(x2, w1b, b1b, w2b, b2b,
                                        compute_dtype=jnp.float32,
                                        batch_tile=16)
    out2 = jax.block_until_ready(out2)
    assert out2.shape == (b2n, dn2)
    assert jnp.allclose(out2, ref2, atol=1e-4, rtol=1e-4)

    print("KERNEL_OK")
</pallas_src>

<mosaic_0001>
module attributes {stable_mosaic.version = 11 : i64} {
  func.func @_mlp_kernel(%arg0: i32, %arg1: i32, %arg2: memref<8x128xf32, #tpu.memory_space<vmem>>, %arg3: memref<128x128xf32, #tpu.memory_space<vmem>>, %arg4: memref<1x128xf32, #tpu.memory_space<vmem>>, %arg5: memref<128x128xf32, #tpu.memory_space<vmem>>, %arg6: memref<1x128xf32, #tpu.memory_space<vmem>>, %arg7: memref<8x128xf32, #tpu.memory_space<vmem>>, %arg8: memref<8x128xf32, #tpu.memory_space<vmem>>) attributes {dimension_semantics = [#tpu.dimension_semantics<parallel>, #tpu.dimension_semantics<arbitrary>], iteration_bounds = array<i64: 1, 1>, scalar_prefetch = 0 : i64, scratch_operands = 1 : i64, tpu.core_type = #tpu.core_type<tc>, window_params = [{transform_indices = @transform_0, window_bounds = array<i64: 8, 128>}, {transform_indices = @transform_1, window_bounds = array<i64: 128, 128>}, {pipeline_mode = #tpu.pipeline_mode<synchronous>, transform_indices = @transform_2, window_bounds = array<i64: 1, 128>}, {pipeline_mode = #tpu.pipeline_mode<synchronous>, transform_indices = @transform_3, window_bounds = array<i64: 128, 128>}, {pipeline_mode = #tpu.pipeline_mode<synchronous>, transform_indices = @transform_4, window_bounds = array<i64: 1, 128>}, {transform_indices = @transform_5, window_bounds = array<i64: 8, 128>}]} {
    %c0_i32 = arith.constant 0 : i32
    %0 = arith.cmpi eq, %arg1, %c0_i32 : i32
    %1 = arith.extui %0 : i1 to i32
    %c0_i32_0 = arith.constant 0 : i32
    %2 = arith.cmpi ne, %1, %c0_i32_0 : i32
    scf.if %2 {
      %cst_14 = arith.constant 0.000000e+00 : f32
      %23 = vector.broadcast %cst_14 : f32 to vector<8x128xf32>
      %c0_15 = arith.constant 0 : index
      %c0_16 = arith.constant 0 : index
      %24 = vector.load %arg8[%c0_15, %c0_16] : memref<8x128xf32, #tpu.memory_space<vmem>>, vector<8x128xf32>
      tpu.vector_store %arg8[%c0_15, %c0_16], %23 {strides = array<i32>} : memref<8x128xf32, #tpu.memory_space<vmem>>, vector<8x128xf32>,
    } else {
    }
    %c0 = arith.constant 0 : index
    %c0_1 = arith.constant 0 : index
    %3 = vector.load %arg2[%c0, %c0_1] : memref<8x128xf32, #tpu.memory_space<vmem>>, vector<8x128xf32>
    %c0_2 = arith.constant 0 : index
    %c0_3 = arith.constant 0 : index
    %4 = vector.load %arg3[%c0_2, %c0_3] : memref<128x128xf32, #tpu.memory_space<vmem>>, vector<128x128xf32>
    %cst = arith.constant dense<0.000000e+00> : vector<8x128xf32>
    %5 = tpu.matmul %3, %4, %cst {dimension_numbers = #tpu.dot_dimension_numbers<[1], [0], [0], [1], [0, 0, 1, 1], [], []>} : vector<8x128xf32>, vector<128x128xf32>, vector<8x128xf32> -> vector<8x128xf32>
    %6 = arith.index_cast %arg1 : i32 to index
    %c0_4 = arith.constant 0 : index
    %7 = vector.load %arg4[%6, %c0_4] : memref<1x128xf32, #tpu.memory_space<vmem>>, vector<1x128xf32>
    %8 = vector.broadcast %7 : vector<1x128xf32> to vector<8x128xf32>
    %9 = arith.addf %5, %8 : vector<8x128xf32>
    %cst_5 = arith.constant 0.000000e+00 : f32
    %10 = vector.broadcast %cst_5 : f32 to vector<8x128xf32>
    %11 = arith.maximumf %9, %10 : vector<8x128xf32>
    %c128_i32 = arith.constant 128 : i32
    %12 = arith.muli %arg1, %c128_i32 : i32
    %13 = tpu.assume_multiple %12, 128 : i32
    %14 = arith.index_cast %13 : i32 to index
    %c0_6 = arith.constant 0 : index
    %15 = vector.load %arg5[%14, %c0_6] : memref<128x128xf32, #tpu.memory_space<vmem>>, vector<128x128xf32>
    %c0_7 = arith.constant 0 : index
    %c0_8 = arith.constant 0 : index
    %16 = vector.load %arg8[%c0_7, %c0_8] : memref<8x128xf32, #tpu.memory_space<vmem>>, vector<8x128xf32>
    %cst_9 = arith.constant dense<0.000000e+00> : vector<8x128xf32>
    %17 = tpu.matmul %11, %15, %cst_9 {dimension_numbers = #tpu.dot_dimension_numbers<[1], [0], [0], [1], [0, 0, 1, 1], [], []>} : vector<8x128xf32>, vector<128x128xf32>, vector<8x128xf32> -> vector<8x128xf32>
    %18 = arith.addf %16, %17 : vector<8x128xf32>
    %c0_10 = arith.constant 0 : index
    %c0_11 = arith.constant 0 : index
    %19 = vector.load %arg8[%c0_10, %c0_11] : memref<8x128xf32, #tpu.memory_space<vmem>>, vector<8x128xf32>
    tpu.vector_store %arg8[%c0_10, %c0_11], %18 {strides = array<i32>} : memref<8x128xf32, #tpu.memory_space<vmem>>, vector<8x128xf32>,
    %c0_i32_12 = arith.constant 0 : i32
    %20 = arith.cmpi eq, %arg1, %c0_i32_12 : i32
    %21 = arith.extui %20 : i1 to i32
    %c0_i32_13 = arith.constant 0 : i32
    %22 = arith.cmpi ne, %21, %c0_i32_13 : i32
    scf.if %22 {
      %c0_14 = arith.constant 0 : index
      %c0_15 = arith.constant 0 : index
      %23 = vector.load %arg8[%c0_14, %c0_15] : memref<8x128xf32, #tpu.memory_space<vmem>>, vector<8x128xf32>
      %c0_16 = arith.constant 0 : index
      %c0_17 = arith.constant 0 : index
      %24 = vector.load %arg6[%c0_16, %c0_17] : memref<1x128xf32, #tpu.memory_space<vmem>>, vector<1x128xf32>
      %25 = vector.broadcast %24 : vector<1x128xf32> to vector<8x128xf32>
      %26 = arith.addf %23, %25 : vector<8x128xf32>
      %c0_18 = arith.constant 0 : index
      %c0_19 = arith.constant 0 : index
      %27 = vector.load %arg7[%c0_18, %c0_19] : memref<8x128xf32, #tpu.memory_space<vmem>>, vector<8x128xf32>
      tpu.vector_store %arg7[%c0_18, %c0_19], %26 {strides = array<i32>} : memref<8x128xf32, #tpu.memory_space<vmem>>, vector<8x128xf32>,
    } else {
    }
    return
  }
  func.func @transform_0(%arg0: i32, %arg1: i32) -> (i32, i32) {
    %c0_i32 = arith.constant 0 : i32
    %c0_i32_0 = arith.constant 0 : i32
    return %arg0, %c0_i32 : i32, i32
  }
  func.func @transform_1(%arg0: i32, %arg1: i32) -> (i32, i32) {
    %c0_i32 = arith.constant 0 : i32
    %c0_i32_0 = arith.constant 0 : i32
    return %c0_i32, %arg1 : i32, i32
  }
  func.func @transform_2(%arg0: i32, %arg1: i32) -> (i32, i32) {
    %c0_i32 = arith.constant 0 : i32
    %c0_i32_0 = arith.constant 0 : i32
    %c0_i32_1 = arith.constant 0 : i32
    return %c0_i32, %c0_i32_0 : i32, i32
  }
  func.func @transform_3(%arg0: i32, %arg1: i32) -> (i32, i32) {
    %c0_i32 = arith.constant 0 : i32
    %c0_i32_0 = arith.constant 0 : i32
    %c0_i32_1 = arith.constant 0 : i32
    return %c0_i32, %c0_i32_0 : i32, i32
  }
  func.func @transform_4(%arg0: i32, %arg1: i32) -> (i32, i32) {
    %c0_i32 = arith.constant 0 : i32
    %c0_i32_0 = arith.constant 0 : i32
    %c0_i32_1 = arith.constant 0 : i32
    return %c0_i32, %c0_i32_0 : i32, i32
  }
  func.func @transform_5(%arg0: i32, %arg1: i32) -> (i32, i32) {
    %c0_i32 = arith.constant 0 : i32
    %c0_i32_0 = arith.constant 0 : i32
    return %arg0, %c0_i32 : i32, i32
  }
}

</mosaic_0001>

<llo_original>
// kernel: tpu_custom_call.1
$region0: #{tpu_custom_call.1}
  #allocation0 [shape = 'u32[]', space=smem, size = 0x4, offset = 0x4, fixed_abs, tag = 'smem constant byte address 0x4 - core index']
  #allocation1 [shape = 'u32[144,128]{1,0:T(1,128)}', space=vmem, size = 0x12000, scoped, tag = 'internal scratch']
  #allocation2 [shape = 'f32[8,128]{1,0:T(8,128)}', space=vmem, size = 0x1000, scoped, tag = 'scratch operand']
  %s0 = inlined_call_operand.hbm [shape: f32[8,128], index: 0, kind: input, shape index: {}]
  %s1 = inlined_call_operand.hbm [shape: f32[128,128], index: 1, kind: input, shape index: {}]
  %s2 = inlined_call_operand.vmem [shape: f32[1,128], index: 2, kind: input, shape index: {}]
  %s3 = inlined_call_operand.hbm [shape: f32[128,128], index: 3, kind: input, shape index: {}]
  %s4 = inlined_call_operand.vmem [shape: f32[1,128], index: 4, kind: input, shape index: {}]
  %s5 = inlined_call_operand.hbm [shape: f32[8,128], index: 5, kind: output, shape index: {}]
  %s6 = sld [smem:[#allocation0]]
  $region50: #{tpu_custom_call.1} parent=0
    _
  %s8 = ssub.s32 1, %s6
  %s9 = scalar_select 0, %s8, %s6
  $region1: #{tpu_custom_call.1} parent=0
    #allocation3 [shape = 'u8[4096]{0}', space=vmem, size = 0x1000, scoped, tag = 'input window, operand 0, single buffered']
    #allocation4 [shape = 's32[1]{0}', space=sflag, size = 0x4, scoped, tag = 'scoped memory for tpu_custom_call.1']
    #allocation5 [shape = 's32[1]{0}', space=sflag, size = 0x4, scoped, tag = 'scoped memory for tpu_custom_call.1']
    #allocation6 [shape = 'u8[65536]{0}', space=vmem, size = 0x10000, scoped, tag = 'input window, operand 1, single buffered']
    #allocation7 [shape = 's32[1]{0}', space=sflag, size = 0x4, scoped, tag = 'scoped memory for tpu_custom_call.1']
    #allocation8 [shape = 'u8[65536]{0}', space=vmem, size = 0x10000, scoped, tag = 'input window, operand 3, single buffered']
    #allocation9 [shape = 'u8[4096]{0}', space=vmem, size = 0x1000, scoped, tag = 'output window, operand 0, single buffered']
    %10 = vsyncpa [#allocation4], 0
    %11 = vsyncpa [#allocation7], 0
    %12 = vsyncpa [#allocation5], 0
    // Predicated region
    $region2: #{tpu_custom_call.1} parent=1 // pred_check
      _
    $region3: #{tpu_custom_call.1} parent=1 // pred_check_branch
      %14 = sbr.rel (0) target = $region5
    $region4: #{tpu_custom_call.1} parent=1 // pred_region
      %s16 = ssub.s32 128, 128
      %17 = vsyncadd [#allocation4], %s16
      %s19 = sshll.u32 [#allocation3], 4
      %s20 = int_to_ptr.vmem [resolvable:$true] %s19
      %22 = dma.hbm_to_vmem [thread:$0]  %s0, 128, %s20, [#allocation4]
    $region5: #{tpu_custom_call.1} parent=1 // pred_fallthru
      _
    // Predicated region
    $region6: #{tpu_custom_call.1} parent=1 // pred_check
      _
    $region7: #{tpu_custom_call.1} parent=1 // pred_check_branch
      %24 = sbr.rel (0) target = $region9
    $region8: #{tpu_custom_call.1} parent=1 // pred_region
      %s26 = ssub.s32 2048, 2048
      %27 = vsyncadd [#allocation7], %s26
      %s28 = sshll.u32 [#allocation6], 4
      %s29 = int_to_ptr.vmem [resolvable:$true] %s28
      %34 = dma.hbm_to_vmem [thread:$0]  %s1, 2048, %s29, [#allocation7], 128, 128, 8
    $region9: #{tpu_custom_call.1} parent=1 // pred_fallthru
      _
    // Predicated region
    $region10: #{tpu_custom_call.1} parent=1 // pred_check
      _
    $region11: #{tpu_custom_call.1} parent=1 // pred_check_branch
      %36 = sbr.rel (0) target = $region13
    $region12: #{tpu_custom_call.1} parent=1 // pred_region
      _
    $region13: #{tpu_custom_call.1} parent=1 // pred_fallthru
      _
    // Predicated region
    $region14: #{tpu_custom_call.1} parent=1 // pred_check
      _
    $region15: #{tpu_custom_call.1} parent=1 // pred_check_branch
      %38 = sbr.rel (0) target = $region17
    $region16: #{tpu_custom_call.1} parent=1 // pred_region
      %s40 = ssub.s32 2048, 2048
      %41 = vsyncadd [#allocation7], %s40
      %s42 = sshll.u32 [#allocation8], 4
      %s43 = int_to_ptr.vmem [resolvable:$true] %s42
      %48 = dma.hbm_to_vmem [thread:$0]  %s3, 2048, %s43, [#allocation7], 128, 128, 8
    $region17: #{tpu_custom_call.1} parent=1 // pred_fallthru
      _
    // Predicated region
    $region18: #{tpu_custom_call.1} parent=1 // pred_check
      _
    $region19: #{tpu_custom_call.1} parent=1 // pred_check_branch
      %50 = sbr.rel (0) target = $region21
    $region20: #{tpu_custom_call.1} parent=1 // pred_region
      _
    $region21: #{tpu_custom_call.1} parent=1 // pred_fallthru
      _
    // Predicated region
    $region22: #{tpu_custom_call.1} parent=1 // pred_check
      _
    $region23: #{tpu_custom_call.1} parent=1 // pred_check_branch
      %52 = sbr.rel (0) target = $region25
    $region24: #{tpu_custom_call.1} parent=1 // pred_region
      %53 = dma.done [#allocation4], 128
    $region25: #{tpu_custom_call.1} parent=1 // pred_fallthru
      _
    // Predicated region
    $region26: #{tpu_custom_call.1} parent=1 // pred_check
      _
    $region27: #{tpu_custom_call.1} parent=1 // pred_check_branch
      %55 = sbr.rel (0) target = $region29
    $region28: #{tpu_custom_call.1} parent=1 // pred_region
      %56 = dma.done [#allocation7], 2048
    $region29: #{tpu_custom_call.1} parent=1 // pred_fallthru
      _
    // Predicated region
    $region30: #{tpu_custom_call.1} parent=1 // pred_check
      _
    $region31: #{tpu_custom_call.1} parent=1 // pred_check_branch
      %58 = sbr.rel (0) target = $region33
    $region32: #{tpu_custom_call.1} parent=1 // pred_region
      %59 = dma.done [#allocation7], 2048
    $region33: #{tpu_custom_call.1} parent=1 // pred_fallthru
      _
    %p60 = scmp.eq.s32.totalorder 0, 0
    // Predicated region
    $region34: #{tpu_custom_call.1} parent=1 // pred_check
      %p61 = pneg %p60
    $region35: #{tpu_custom_call.1} parent=1 // pred_check_branch
      %63 = sbr.rel (%p61) target = $region37
    $region36: #{tpu_custom_call.1} parent=1 // pred_region
      %64 = vst [vmem:[#allocation2] sm:$0xff] 0.0
    $region37: #{tpu_custom_call.1} parent=1 // pred_fallthru
      _
    %v65 = vld [vmem:[#allocation3] sm:$0xff]
    %v66 = vld [vmem:[#allocation6] sm:$0xff]
    %v67 = vld [vmem:[#allocation6 + $0x8] sm:$0xff]
    %v68 = vld [vmem:[#allocation6 + $0x10] sm:$0xff]
    %v69 = vld [vmem:[#allocation6 + $0x18] sm:$0xff]
    %v70 = vld [vmem:[#allocation6 + $0x20] sm:$0xff]
    %v71 = vld [vmem:[#allocation6 + $0x28] sm:$0xff]
    %v72 = vld [vmem:[#allocation6 + $0x30] sm:$0xff]
    %v73 = vld [vmem:[#allocation6 + $0x38] sm:$0xff]
    %v74 = vld [vmem:[#allocation6 + $0x40] sm:$0xff]
    %v75 = vld [vmem:[#allocation6 + $0x48] sm:$0xff]
    %v76 = vld [vmem:[#allocation6 + $0x50] sm:$0xff]
    %v77 = vld [vmem:[#allocation6 + $0x58] sm:$0xff]
    %v78 = vld [vmem:[#allocation6 + $0x60] sm:$0xff]
    %v79 = vld [vmem:[#allocation6 + $0x68] sm:$0xff]
    %v80 = vld [vmem:[#allocation6 + $0x70] sm:$0xff]
    %v81 = vld [vmem:[#allocation6 + $0x78] sm:$0xff]
    %v82 = vld [vmem:[%s2] sm:$0x1]
    %v84 = vlaneseq
    %v85 = vshrl.u32 %v84, 7
    %v86 = vsub.s32 0, %v85
    %v87 = vrot.slane %v82, %v86
    %89 = vmatprep.subr.mxu0 0.0
    %90 = vmatpush1.msra.mxu0 %v66
    %91 = vmatprep.subr.mxu0 0.0
    %92 = vmatpush1.msra.mxu0 %v67
    %93 = vmatprep.subr.mxu0 0.0
    %94 = vmatpush1.msra.mxu0 %v68
    %95 = vmatprep.subr.mxu0 0.0
    %96 = vmatpush1.msra.mxu0 %v69
    %97 = vmatprep.subr.mxu0 0.0
    %98 = vmatpush1.msra.mxu0 %v70
    %99 = vmatprep.subr.mxu0 0.0
    %100 = vmatpush1.msra.mxu0 %v71
    %101 = vmatprep.subr.mxu0 0.0
    %102 = vmatpush1.msra.mxu0 %v72
    %103 = vmatprep.subr.mxu0 0.0
    %104 = vmatpush1.msra.mxu0 %v73
    %105 = vmatprep.subr.mxu0 0.0
    %106 = vmatpush1.msra.mxu0 %v74
    %107 = vmatprep.subr.mxu0 0.0
    %108 = vmatpush1.msra.mxu0 %v75
    %109 = vmatprep.subr.mxu0 0.0
    %110 = vmatpush1.msra.mxu0 %v76
    %111 = vmatprep.subr.mxu0 0.0
    %112 = vmatpush1.msra.mxu0 %v77
    %113 = vmatprep.subr.mxu0 0.0
    %114 = vmatpush1.msra.mxu0 %v78
    %115 = vmatprep.subr.mxu0 0.0
    %116 = vmatpush1.msra.mxu0 %v79
    %117 = vmatprep.subr.mxu0 0.0
    %118 = vmatpush1.msra.mxu0 %v80
    %119 = vmatprep.subr.mxu0 0.0
    %120 = vmatpush1.msra.mxu0 %v81
    %121 = vmatprep.subr.mxu0 0.0
    %122 = vmatpush1.msra.mxu0 0.0
    %123 = vmatprep.subr.mxu0 0.0
    %124 = vmatpush1.msra.mxu0 0.0
    %125 = vmatprep.subr.mxu0 0.0
    %126 = vmatpush1.msra.mxu0 0.0
    %127 = vmatprep.subr.mxu0 0.0
    %128 = vmatpush1.msra.mxu0 0.0
    %129 = vmatprep.subr.mxu0 0.0
    %130 = vmatpush1.msra.mxu0 0.0
    %131 = vmatprep.subr.mxu0 0.0
    %132 = vmatpush1.msra.mxu0 0.0
    %133 = vmatprep.subr.mxu0 0.0
    %134 = vmatpush1.msra.mxu0 0.0
    %135 = vmatprep.subr.mxu0 0.0
    %136 = vmatpush1.msra.mxu0 0.0
    %137 = vmatprep.subr.mxu0 0.0
    %138 = vmatpush1.msra.mxu0 0.0
    %139 = vmatprep.subr.mxu0 0.0
    %140 = vmatpush1.msra.mxu0 0.0
    %141 = vmatprep.subr.mxu0 0.0
    %142 = vmatpush1.msra.mxu0 0.0
    %143 = vmatprep.subr.mxu0 0.0
    %144 = vmatpush1.msra.mxu0 0.0
    %145 = vmatprep.subr.mxu0 0.0
    %146 = vmatpush1.msra.mxu0 0.0
    %147 = vmatprep.subr.mxu0 0.0
    %148 = vmatpush1.msra.mxu0 0.0
    %149 = vmatprep.subr.mxu0 0.0
    %150 = vmatpush1.msra.mxu0 0.0
    %151 = vmatprep.subr.mxu0 0.0
    %152 = vmatpush1.msra.mxu0 0.0
    %153 = vmatprep.mubr.f32.mxu0 0.0
    %154 = vmatmul.mubr.f32.gmra.mrb[0].mxu0 %v65
    %v155 = vpop.f32.mrb[0].mxu0
    %v156 = vadd.f32 %v87, %v155
    %v157 = vpop.f32.mrb[0].mxu0
    %158 = vdwg.mxu0
    %v159 = vmax.f32 %v156, 0.0
    %s160 = smul.u32 0, 128
    %s161 = scalar_lea.vmem [#allocation8], %s160
    %v162 = vld [vmem:[%s161] sm:$0xff]
    %v163 = vld [vmem:[%s161 + $0x8] sm:$0xff]
    %v164 = vld [vmem:[%s161 + $0x10] sm:$0xff]
    %v165 = vld [vmem:[%s161 + $0x18] sm:$0xff]
    %v166 = vld [vmem:[%s161 + $0x20] sm:$0xff]
    %v167 = vld [vmem:[%s161 + $0x28] sm:$0xff]
    %v168 = vld [vmem:[%s161 + $0x30] sm:$0xff]
    %v169 = vld [vmem:[%s161 + $0x38] sm:$0xff]
    %v170 = vld [vmem:[%s161 + $0x40] sm:$0xff]
    %v171 = vld [vmem:[%s161 + $0x48] sm:$0xff]
    %v172 = vld [vmem:[%s161 + $0x50] sm:$0xff]
    %v173 = vld [vmem:[%s161 + $0x58] sm:$0xff]
    %v174 = vld [vmem:[%s161 + $0x60] sm:$0xff]
    %v175 = vld [vmem:[%s161 + $0x68] sm:$0xff]
    %v176 = vld [vmem:[%s161 + $0x70] sm:$0xff]
    %v177 = vld [vmem:[%s161 + $0x78] sm:$0xff]
    %v178 = vld [vmem:[#allocation2] sm:$0xff]
    %179 = vmatprep.subr.mxu0 0.0
    %180 = vmatpush1.msra.mxu0 %v162
    %181 = vmatprep.subr.mxu0 0.0
    %182 = vmatpush1.msra.mxu0 %v163
    %183 = vmatprep.subr.mxu0 0.0
    %184 = vmatpush1.msra.mxu0 %v164
    %185 = vmatprep.subr.mxu0 0.0
    %186 = vmatpush1.msra.mxu0 %v165
    %187 = vmatprep.subr.mxu0 0.0
    %188 = vmatpush1.msra.mxu0 %v166
    %189 = vmatprep.subr.mxu0 0.0
    %190 = vmatpush1.msra.mxu0 %v167
    %191 = vmatprep.subr.mxu0 0.0
    %192 = vmatpush1.msra.mxu0 %v168
    %193 = vmatprep.subr.mxu0 0.0
    %194 = vmatpush1.msra.mxu0 %v169
    %195 = vmatprep.subr.mxu0 0.0
    %196 = vmatpush1.msra.mxu0 %v170
    %197 = vmatprep.subr.mxu0 0.0
    %198 = vmatpush1.msra.mxu0 %v171
    %199 = vmatprep.subr.mxu0 0.0
    %200 = vmatpush1.msra.mxu0 %v172
    %201 = vmatprep.subr.mxu0 0.0
    %202 = vmatpush1.msra.mxu0 %v173
    %203 = vmatprep.subr.mxu0 0.0
    %204 = vmatpush1.msra.mxu0 %v174
    %205 = vmatprep.subr.mxu0 0.0
    %206 = vmatpush1.msra.mxu0 %v175
    %207 = vmatprep.subr.mxu0 0.0
    %208 = vmatpush1.msra.mxu0 %v176
    %209 = vmatprep.subr.mxu0 0.0
    %210 = vmatpush1.msra.mxu0 %v177
    %211 = vmatprep.subr.mxu0 0.0
    %212 = vmatpush1.msra.mxu0 0.0
    %213 = vmatprep.subr.mxu0 0.0
    %214 = vmatpush1.msra.mxu0 0.0
    %215 = vmatprep.subr.mxu0 0.0
    %216 = vmatpush1.msra.mxu0 0.0
    %217 = vmatprep.subr.mxu0 0.0
    %218 = vmatpush1.msra.mxu0 0.0
    %219 = vmatprep.subr.mxu0 0.0
    %220 = vmatpush1.msra.mxu0 0.0
    %221 = vmatprep.subr.mxu0 0.0
    %222 = vmatpush1.msra.mxu0 0.0
    %223 = vmatprep.subr.mxu0 0.0
    %224 = vmatpush1.msra.mxu0 0.0
    %225 = vmatprep.subr.mxu0 0.0
    %226 = vmatpush1.msra.mxu0 0.0
    %227 = vmatprep.subr.mxu0 0.0
    %228 = vmatpush1.msra.mxu0 0.0
    %229 = vmatprep.subr.mxu0 0.0
    %230 = vmatpush1.msra.mxu0 0.0
    %231 = vmatprep.subr.mxu0 0.0
    %232 = vmatpush1.msra.mxu0 0.0
    %233 = vmatprep.subr.mxu0 0.0
    %234 = vmatpush1.msra.mxu0 0.0
    %235 = vmatprep.subr.mxu0 0.0
    %236 = vmatpush1.msra.mxu0 0.0
    %237 = vmatprep.subr.mxu0 0.0
    %238 = vmatpush1.msra.mxu0 0.0
    %239 = vmatprep.subr.mxu0 0.0
    %240 = vmatpush1.msra.mxu0 0.0
    %241 = vmatprep.subr.mxu0 0.0
    %242 = vmatpush1.msra.mxu0 0.0
    %243 = vmatprep.mubr.f32.mxu0 0.0
    %244 = vmatmul.mubr.f32.gmra.mrb[0].mxu0 %v159
    %v245 = vpop.f32.mrb[0].mxu0
    %v246 = vadd.f32 0.0, %v245
    %v247 = vpop.f32.mrb[0].mxu0
    %248 = vdwg.mxu0
    %v249 = vadd.f32 %v178, %v246
    %250 = vst [vmem:[#allocation2] sm:$0xff] %v249
    // Predicated region
    $region38: #{tpu_custom_call.1} parent=1 // pred_check
      %p251 = pneg %p60
    $region39: #{tpu_custom_call.1} parent=1 // pred_check_branch
      %253 = sbr.rel (%p251) target = $region41
    $region40: #{tpu_custom_call.1} parent=1 // pred_region
      %v254 = vld [vmem:[#allocation2] sm:$0xff]
      %v255 = vld [vmem:[%s4] sm:$0x1]
      %v257 = vlaneseq
      %v258 = vshrl.u32 %v257, 7
      %v259 = vsub.s32 0, %v258
      %v260 = vrot.slane %v255, %v259
      %v262 = vadd.f32 %v254, %v260
      %263 = vst [vmem:[#allocation9] sm:$0xff] %v262
    $region41: #{tpu_custom_call.1} parent=1 // pred_fallthru
      _
    // Predicated region
    $region42: #{tpu_custom_call.1} parent=1 // pred_check
      _
    $region43: #{tpu_custom_call.1} parent=1 // pred_check_branch
      %265 = sbr.rel (0) target = $region45
    $region44: #{tpu_custom_call.1} parent=1 // pred_region
      %s267 = ssub.s32 128, 128
      %268 = vsyncadd [#allocation5], %s267
      %s270 = sshll.u32 [#allocation9], 4
      %s271 = int_to_ptr.vmem [resolvable:$true] %s270
      %273 = dma.vmem_to_hbm [thread:$0]  %s271, 128, %s5, [#allocation5]
    $region45: #{tpu_custom_call.1} parent=1 // pred_fallthru
      _
    // Predicated region
    $region46: #{tpu_custom_call.1} parent=1 // pred_check
      _
    $region47: #{tpu_custom_call.1} parent=1 // pred_check_branch
      %275 = sbr.rel (0) target = $region49
    $region48: #{tpu_custom_call.1} parent=1 // pred_region
      %276 = dma.done [#allocation5], 128
    $region49: #{tpu_custom_call.1} parent=1 // pred_fallthru
      _
    %277 = vsyncpa [#allocation4], 1
    %278 = vsyncpa [#allocation7], 1
    %279 = vsyncpa [#allocation5], 1

</llo_original>
